<compile_context>
chip_gen: v7x
topology: tpu7x:2x2x1
jax: 0.10.0
libtpu: 0.0.40
codegen_flags: <defaults>
</compile_context>

<pallas_src>
import functools

import jax
import jax.numpy as jnp
from jax import lax
from jax.experimental import pallas as pl
from jax.experimental.pallas import tpu as pltpu


def _round_up(x: int, m: int) -> int:
    return (x + m - 1) // m * m


def _num_tensorcores() -> int:
    """Best-effort: 2 for chips whose Pallas 'parallel' axis spans 2 TensorCores."""
    try:
        kind = (jax.devices()[0].device_kind or "").lower()
    except Exception:
        return 1
    if "v7" in kind or "v4" in kind or "v5p" in kind:
        return 2
    return 1


def _contrastive_kernel(pair_i_ref, pair_j_ref,      # scalar prefetch (SMEM)
                        a_ref, b_ref,                # (tm, tk) / (tn, tk) tiles of normalized x
                        o_ref,                       # (1, 1, 128) per-pair partial sum
                        *scratch,                    # (tm, tn) f32 accumulator iff kt > 1
                        margin: float, batch: int, tm: int, tn: int, kt: int):
    p = pl.program_id(0)

    # Gram tile on the MXU; contraction expressed directly (no .T / no transpose).
    gram_part = lax.dot_general(
        a_ref[...], b_ref[...],
        dimension_numbers=(((1,), (1,)), ((), ())),
        preferred_element_type=jnp.float32,
    )

    def _finalize(gram):
        ib = pair_i_ref[p]
        jb = pair_j_ref[p]
        # x was L2-normalized (f32) in the wrapper, so gram IS the similarity tile.
        hinge = jnp.maximum(gram - jnp.float32(margin), 0.0)

        min_row = ib * tm
        max_row = min_row + (tm - 1)
        min_col = jb * tn
        max_col = min_col + (tn - 1)
        # Tiles that are strictly above the diagonal and fully inside [0, batch)
        # need no masking at all (padded rows/cols cannot appear in them).
        needs_mask = jnp.logical_or(min_col <= max_row, max_col >= batch)

        @pl.when(needs_mask)
        def _masked():
            row = min_row + lax.broadcasted_iota(jnp.int32, (tm, tn), 0)
            col = min_col + lax.broadcasted_iota(jnp.int32, (tm, tn), 1)
            # col > row >= batch is impossible, so (col < batch) also kills padded rows.
            keep = jnp.logical_and(col > row, col < batch)
            o_ref[...] = jnp.broadcast_to(
                jnp.sum(jnp.where(keep, hinge, 0.0)), (1, 1, 128))

        @pl.when(jnp.logical_not(needs_mask))
        def _unmasked():
            o_ref[...] = jnp.broadcast_to(jnp.sum(hinge), (1, 1, 128))

    if kt == 1:
        # Single K step: no scratch, no init, no read-modify-write pass.
        _finalize(gram_part)
    else:
        (gram_acc,) = scratch
        k = pl.program_id(1)

        @pl.when(k == 0)
        def _store():
            gram_acc[...] = gram_part

        @pl.when(k > 0)
        def _accum():
            gram_acc[...] = gram_acc[...] + gram_part

        @pl.when(k == pl.num_programs(1) - 1)
        def _done():
            _finalize(gram_acc[...])


def _contrastive_loss_pallas(embeddings: jax.Array, margin: float,
                             use_bf16: bool | None = None) -> jax.Array:
    b, d = embeddings.shape
    xf = embeddings.astype(jnp.float32)

    # L2-normalize in f32 (mirrors F.normalize's eps=1e-12 clamp). This fuses with
    # the pad/cast pass below, so no extra (B, D) traffic vs. the raw-x version.
    eps = jnp.float32(1e-12)
    inv_n = lax.rsqrt(jnp.maximum(jnp.sum(xf * xf, axis=1, keepdims=True), eps * eps))
    xn = xf * inv_n

    # ---- row/col tile selection -------------------------------------------------
    bp8 = _round_up(b, 8)
    if bp8 <= 1024:
        # Single row/col tile: minimal padding (<= 7 rows), single pair, max reuse.
        bp, tm = bp8, bp8
    else:
        best = None
        for cand in (1024, 768, 512, 384, 256):
            bp_c = _round_up(b, cand)
            gi_c = bp_c // cand
            traffic = gi_c * (gi_c + 1) * cand                       # ~ HBM reads of x rows
            mxu_pen = gi_c * (gi_c + 1) * cand * cand // (2 * 512)   # padded-MXU-area penalty
            score = traffic + mxu_pen
            if best is None or score < best[0]:
                best = (score, cand, bp_c)
        _, tm, bp = best
    tn = tm

    # ---- K (reduction) tile selection --------------------------------------------
    dp0 = _round_up(d, 128)
    if dp0 <= 1024:
        tk, dp = dp0, dp0                      # single K step
    else:
        best = None
        for cand in range(1024, 255, -128):    # 1024, 896, ..., 256 (all 128-multiples)
            dpad = _round_up(dp0, cand)
            key = (dpad, -cand)                # least padding, then largest tk
            if best is None or key < best[0]:
                best = (key, cand, dpad)
        _, tk, dp = best
    kt = dp // tk

    # v7x (2 TensorCores): if the pair grid would have a single entry, split the
    # column dimension in two so the 'parallel' axis feeds both cores — but only
    # when it is free (bp divisible by 256 keeps tn a 128-multiple, no extra pad).
    if _num_tensorcores() >= 2 and bp // tm == 1 and bp % 256 == 0:
        tn = bp // 2

    # bf16 MXU inputs (f32 accumulation) whenever the matmul is non-trivial.
    if use_bf16 is None:
        use_bf16 = (b * d) >= 16 * 1024
    mm_dtype = jnp.bfloat16 if use_bf16 else jnp.float32

    x_mm = jnp.pad(xn, ((0, bp - b), (0, dp - d))).astype(mm_dtype)

    # Pair grid: every (row block, col block) whose window can contain a strict
    # upper-triangle entry (reduces to j >= i when tm == tn).
    gi_rows = bp // tm
    gi_cols = bp // tn
    pairs = [(i, j) for i in range(gi_rows) for j in range(gi_cols)
             if (j + 1) * tn - 1 > i * tm]
    npairs = len(pairs)
    pair_i = jnp.asarray([pr[0] for pr in pairs], jnp.int32)
    pair_j = jnp.asarray([pr[1] for pr in pairs], jnp.int32)

    kernel = functools.partial(
        _contrastive_kernel, margin=float(margin), batch=b, tm=tm, tn=tn, kt=kt)

    itemsize = jnp.dtype(mm_dtype).itemsize
    scratch_shapes = [] if kt == 1 else [pltpu.VMEM((tm, tn), jnp.float32)]
    est = (2 * (tm + tn) * tk * itemsize       # double-buffered A/B tiles
           + (tm * tn * 4 if kt > 1 else 0)    # f32 gram accumulator
           + 2 * 128 * 4)                      # per-pair output block
    # Scale the scoped-VMEM limit with the larger tiles; cap with headroom for v7x.
    vmem_limit = int(min(48 * 1024 * 1024,
                         max(8 * 1024 * 1024, 2 * est + tm * tn * 4)))

    cost = pl.CostEstimate(
        flops=2 * npairs * tm * tn * dp,
        transcendentals=0,
        bytes_accessed=npairs * (tm + tn) * dp * itemsize + npairs * 128 * 4,
    )

    partials = pl.pallas_call(
        kernel,
        out_shape=jax.ShapeDtypeStruct((npairs, 1, 128), jnp.float32),
        grid_spec=pltpu.PrefetchScalarGridSpec(
            num_scalar_prefetch=2,
            grid=(npairs, kt),                      # reduction axis last
            in_specs=[
                pl.BlockSpec((tm, tk), lambda p, k, pi, pj: (pi[p], k)),
                pl.BlockSpec((tn, tk), lambda p, k, pi, pj: (pj[p], k)),
            ],
            out_specs=pl.BlockSpec((1, 1, 128), lambda p, k, pi, pj: (p, 0, 0)),
            scratch_shapes=scratch_shapes,
        ),
        compiler_params=pltpu.CompilerParams(
            dimension_semantics=("parallel", "arbitrary"),
            vmem_limit_bytes=vmem_limit,
        ),
        cost_estimate=cost,
    )(pair_i, pair_j, x_mm, x_mm)

    count = b * (b - 1) // 2
    return jnp.sum(partials[:, 0, 0]) / jnp.float32(count)


def _contrastive_loss_jnp(embeddings: jax.Array, margin: float) -> jax.Array:
    """Vectorized plain-JAX path (tiny inputs / large-shape reference)."""
    x = embeddings.astype(jnp.float32)
    norm = jnp.sqrt(jnp.sum(x * x, axis=1, keepdims=True))
    xn = x / jnp.maximum(norm, 1e-12)
    sim = xn @ xn.T
    b = x.shape[0]
    upper = jnp.triu(jnp.ones((b, b), dtype=bool), k=1)
    count = b * (b - 1) // 2
    return jnp.sum(jnp.where(upper, jnp.maximum(sim - margin, 0.0), 0.0)) / jnp.float32(count)


def contrastive_loss(embeddings: jax.Array, margin: float = 1.0,
                     *, use_pallas: bool | None = None,
                     use_bf16: bool | None = None) -> jax.Array:
    """Pallas equivalent of ContrastiveLoss.forward. embeddings: (B, D)."""
    b, d = embeddings.shape
    if b < 2:
        # Mirrors the PyTorch early-return (static shape decision).
        return jnp.float32(0.0)
    if use_pallas is None:
        # Tiny problems are pure launch/DMA overhead — let XLA fuse them instead.
        use_pallas = (b * d) >= 64 * 1024
    if not use_pallas:
        return _contrastive_loss_jnp(embeddings, margin)
    return _contrastive_loss_pallas(embeddings, margin, use_bf16=use_bf16)


def _reference_loss_loops(embeddings: jax.Array, margin: float = 1.0) -> jax.Array:
    """Plain-JAX reference mirroring the PyTorch double loop (small sanity check)."""
    x = embeddings.astype(jnp.float32)
    norm = jnp.sqrt(jnp.sum(x * x, axis=1, keepdims=True))
    xn = x / jnp.maximum(norm, 1e-12)
    sim = xn @ xn.T
    b = x.shape[0]
    loss = 0.0
    count = 0
    for i in range(b):
        for j in range(i + 1, b):
            loss = loss + jnp.maximum(sim[i, j] - margin, 0.0)
            count += 1
    return loss / count


if __name__ == "__main__":
    key = jax.random.PRNGKey(0)
    k_small, k_large = jax.random.split(key)

    # Small case consistent with the module (batch=8, hidden=32); forces the Pallas
    # path. This stays on the f32 MXU path, so the tight tolerance holds.
    B, D = 8, 32
    emb = jax.random.normal(k_small, (B, D), dtype=jnp.float32)
    margin = 0.2   # so the relu(sim - margin) terms are not all zero at this scale
    loss = contrastive_loss(emb, margin=margin, use_pallas=True)
    loss = jax.block_until_ready(loss)
    ref = _reference_loss_loops(emb, margin=margin)
    assert jnp.allclose(loss, ref, atol=2e-5, rtol=1e-5), (loss, ref)

    # Larger case exercising the single 272-row tile (no padding blowup), the
    # single-K-step fast path, masking, and the bf16 MXU path (looser tolerance).
    B2, D2 = 272, 640
    emb2 = jax.random.normal(k_large, (B2, D2), dtype=jnp.float32)
    loss2 = contrastive_loss(emb2, margin=0.05, use_pallas=True)
    loss2 = jax.block_until_ready(loss2)
    ref2 = _contrastive_loss_jnp(emb2, margin=0.05)
    assert jnp.allclose(loss2, ref2, atol=1e-3, rtol=2e-2), (loss2, ref2)

    print("KERNEL_OK")
</pallas_src>

<mosaic_0001>
module attributes {stable_mosaic.version = 11 : i64} {
  func.func @_contrastive_kernel(%arg0: i32, %arg1: i32, %arg2: memref<1xi32, #tpu.memory_space<smem>>, %arg3: memref<1xi32, #tpu.memory_space<smem>>, %arg4: memref<8x128xf32, #tpu.memory_space<vmem>>, %arg5: memref<8x128xf32, #tpu.memory_space<vmem>>, %arg6: memref<1x1x128xf32, #tpu.memory_space<vmem>>) attributes {dimension_semantics = [#tpu.dimension_semantics<parallel>, #tpu.dimension_semantics<arbitrary>], iteration_bounds = array<i64: 1, 1>, scalar_prefetch = 2 : i64, scratch_operands = 0 : i64, tpu.core_type = #tpu.core_type<tc>, window_params = [{transform_indices = @transform_0, window_bounds = array<i64: 8, 128>}, {transform_indices = @transform_1, window_bounds = array<i64: 8, 128>}, {transform_indices = @transform_2, window_bounds = array<i64: 1, 1, 128>}]} {
    %c0 = arith.constant 0 : index
    %c0_0 = arith.constant 0 : index
    %0 = vector.load %arg4[%c0, %c0_0] : memref<8x128xf32, #tpu.memory_space<vmem>>, vector<8x128xf32>
    %c0_1 = arith.constant 0 : index
    %c0_2 = arith.constant 0 : index
    %1 = vector.load %arg5[%c0_1, %c0_2] : memref<8x128xf32, #tpu.memory_space<vmem>>, vector<8x128xf32>
    %cst = arith.constant dense<0.000000e+00> : vector<8x8xf32>
    %2 = tpu.matmul %0, %1, %cst {dimension_numbers = #tpu.dot_dimension_numbers<[1], [1], [0], [0], [0, 0, 1, 0], [], []>} : vector<8x128xf32>, vector<8x128xf32>, vector<8x8xf32> -> vector<8x8xf32>
    %3 = arith.index_cast %arg0 : i32 to index
    %4 = memref.load %arg2[%3] : memref<1xi32, #tpu.memory_space<smem>>
    %5 = arith.index_cast %arg0 : i32 to index
    %6 = memref.load %arg3[%5] : memref<1xi32, #tpu.memory_space<smem>>
    %cst_3 = arith.constant 2.000000e-01 : f32
    %7 = vector.broadcast %cst_3 : f32 to vector<8x8xf32>
    %8 = arith.subf %2, %7 : vector<8x8xf32>
    %cst_4 = arith.constant 0.000000e+00 : f32
    %9 = vector.broadcast %cst_4 : f32 to vector<8x8xf32>
    %10 = arith.maximumf %8, %9 : vector<8x8xf32>
    %c8_i32 = arith.constant 8 : i32
    %11 = arith.muli %4, %c8_i32 : i32
    %c7_i32 = arith.constant 7 : i32
    %12 = arith.addi %11, %c7_i32 : i32
    %c8_i32_5 = arith.constant 8 : i32
    %13 = arith.muli %6, %c8_i32_5 : i32
    %c7_i32_6 = arith.constant 7 : i32
    %14 = arith.addi %13, %c7_i32_6 : i32
    %15 = arith.cmpi sle, %13, %12 : i32
    %c8_i32_7 = arith.constant 8 : i32
    %16 = arith.cmpi sge, %14, %c8_i32_7 : i32
    %17 = arith.ori %15, %16 : i1
    %18 = arith.extui %17 : i1 to i32
    %c0_i32 = arith.constant 0 : i32
    %19 = arith.cmpi ne, %18, %c0_i32 : i32
    scf.if %19 {
      %23 = tpu.iota {dimensions = array<i32: 0>} : vector<8x8xi32>
      %24 = vector.broadcast %11 : i32 to vector<8x8xi32>
      %25 = arith.addi %24, %23 : vector<8x8xi32>
      %26 = tpu.iota {dimensions = array<i32: 1>} : vector<8x8xi32>
      %27 = vector.broadcast %13 : i32 to vector<8x8xi32>
      %28 = arith.addi %27, %26 : vector<8x8xi32>
      %29 = arith.cmpi sgt, %28, %25 : vector<8x8xi32>
      %c8_i32_9 = arith.constant 8 : i32
      %30 = vector.broadcast %c8_i32_9 : i32 to vector<8x8xi32>
      %31 = arith.cmpi slt, %28, %30 : vector<8x8xi32>
      %32 = arith.andi %29, %31 : vector<8x8xi1>
      %cst_10 = arith.constant 0.000000e+00 : f32
      %33 = vector.broadcast %cst_10 : f32 to vector<8x8xf32>
      %34 = arith.select %32, %10, %33 : vector<8x8xi1>, vector<8x8xf32>
      %35 = vector.shape_cast %34 : vector<8x8xf32> to vector<1x8x8xf32>
      %cst_11 = arith.constant dense<0.000000e+00> : vector<1xf32>
      %36 = vector.multi_reduction <add>, %35, %cst_11 [1, 2] : vector<1x8x8xf32> to vector<1xf32>
      %37 = vector.shape_cast %36 : vector<1xf32> to vector<1x1x1xf32>
      %38 = vector.extract %37[0, 0, 0] : f32 from vector<1x1x1xf32>
      %39 = vector.broadcast %38 : f32 to vector<1x1x128xf32>
      %c0_12 = arith.constant 0 : index
      %c0_13 = arith.constant 0 : index
      %c0_14 = arith.constant 0 : index
      %40 = vector.load %arg6[%c0_12, %c0_13, %c0_14] : memref<1x1x128xf32, #tpu.memory_space<vmem>>, vector<1x1x128xf32>
      tpu.vector_store %arg6[%c0_12, %c0_13, %c0_14], %39 {strides = array<i32>} : memref<1x1x128xf32, #tpu.memory_space<vmem>>, vector<1x1x128xf32>,
    } else {
    }
    %true = arith.constant true
    %20 = arith.xori %17, %true : i1
    %21 = arith.extui %20 : i1 to i32
    %c0_i32_8 = arith.constant 0 : i32
    %22 = arith.cmpi ne, %21, %c0_i32_8 : i32
    scf.if %22 {
      %23 = vector.shape_cast %10 : vector<8x8xf32> to vector<1x8x8xf32>
      %cst_9 = arith.constant dense<0.000000e+00> : vector<1xf32>
      %24 = vector.multi_reduction <add>, %23, %cst_9 [1, 2] : vector<1x8x8xf32> to vector<1xf32>
      %25 = vector.shape_cast %24 : vector<1xf32> to vector<1x1x1xf32>
      %26 = vector.extract %25[0, 0, 0] : f32 from vector<1x1x1xf32>
      %27 = vector.broadcast %26 : f32 to vector<1x1x128xf32>
      %c0_10 = arith.constant 0 : index
      %c0_11 = arith.constant 0 : index
      %c0_12 = arith.constant 0 : index
      %28 = vector.load %arg6[%c0_10, %c0_11, %c0_12] : memref<1x1x128xf32, #tpu.memory_space<vmem>>, vector<1x1x128xf32>
      tpu.vector_store %arg6[%c0_10, %c0_11, %c0_12], %27 {strides = array<i32>} : memref<1x1x128xf32, #tpu.memory_space<vmem>>, vector<1x1x128xf32>,
    } else {
    }
    return
  }
  func.func @transform_0(%arg0: i32, %arg1: i32, %arg2: memref<1xi32, #tpu.memory_space<smem>>, %arg3: memref<1xi32, #tpu.memory_space<smem>>) -> (i32, i32) {
    %0 = arith.index_cast %arg0 : i32 to index
    %1 = memref.load %arg2[%0] : memref<1xi32, #tpu.memory_space<smem>>
    %c0_i32 = arith.constant 0 : i32
    return %1, %arg1 : i32, i32
  }
  func.func @transform_1(%arg0: i32, %arg1: i32, %arg2: memref<1xi32, #tpu.memory_space<smem>>, %arg3: memref<1xi32, #tpu.memory_space<smem>>) -> (i32, i32) {
    %0 = arith.index_cast %arg0 : i32 to index
    %1 = memref.load %arg3[%0] : memref<1xi32, #tpu.memory_space<smem>>
    %c0_i32 = arith.constant 0 : i32
    return %1, %arg1 : i32, i32
  }
  func.func @transform_2(%arg0: i32, %arg1: i32, %arg2: memref<1xi32, #tpu.memory_space<smem>>, %arg3: memref<1xi32, #tpu.memory_space<smem>>) -> (i32, i32, i32) {
    %c0_i32 = arith.constant 0 : i32
    %c0_i32_0 = arith.constant 0 : i32
    %c0_i32_1 = arith.constant 0 : i32
    return %arg0, %c0_i32, %c0_i32_0 : i32, i32, i32
  }
}

</mosaic_0001>

<llo_original>
// kernel: tpu_custom_call.1
$region0: #{tpu_custom_call.1}
  #allocation0 [shape = 'u32[]', space=smem, size = 0x4, offset = 0x4, fixed_abs, tag = 'smem constant byte address 0x4 - core index']
  #allocation1 [shape = 'u32[144,128]{1,0:T(1,128)}', space=vmem, size = 0x12000, scoped, tag = 'internal scratch']
  #allocation2 [shape = 's32[1]{0}', space=sflag, size = 0x4, scoped, tag = 'scoped memory for tpu_custom_call.1']
  #allocation3 [shape = 's32[1]{0:T(128)S(6)}', space=smem, size = 0x200, scoped, tag = 'prefetched SMEM operand 0']
  #allocation4 [shape = 's32[1]{0:T(128)S(6)}', space=smem, size = 0x200, scoped, tag = 'prefetched SMEM operand 1']
  %s0 = inlined_call_operand.<no memory space> [shape: s32[1], index: 0, kind: input, shape index: {}]
  %s1 = inlined_call_operand.<no memory space> [shape: s32[1], index: 1, kind: input, shape index: {}]
  %s2 = inlined_call_operand.hbm [shape: f32[8,128], index: 2, kind: input, shape index: {}]
  %s3 = inlined_call_operand.vmem [shape: f32[8,128], index: 3, kind: input, shape index: {}]
  %s4 = inlined_call_operand.hbm [shape: f32[1,1,128], index: 4, kind: output, shape index: {}]
  %s5 = sld [smem:[#allocation0]]
  $region30: #{tpu_custom_call.1} parent=0
    _
  %s7 = ssub.s32 1, %s5
  %s8 = scalar_select 0, %s7, %s5
  %9 = sst [smem:[#allocation3]] %s0
  %10 = sst [smem:[#allocation4]] %s1
  $region1: #{tpu_custom_call.1} parent=0
    #allocation5 [shape = 'u8[4096]{0}', space=vmem, size = 0x1000, scoped, tag = 'input window, operand 2, single buffered']
    #allocation6 [shape = 's32[1]{0}', space=sflag, size = 0x4, scoped, tag = 'scoped memory for tpu_custom_call.1']
    #allocation7 [shape = 's32[1]{0}', space=sflag, size = 0x4, scoped, tag = 'scoped memory for tpu_custom_call.1']
    #allocation8 [shape = 'u8[512]{0}', space=vmem, size = 0x400, scoped, tag = 'output window, operand 0, single buffered']
    %11 = vsyncpa [#allocation6], 0
    %12 = vsyncpa [#allocation7], 0
    // Predicated region
    $region2: #{tpu_custom_call.1} parent=1 // pred_check
      _
    $region3: #{tpu_custom_call.1} parent=1 // pred_check_branch
      %14 = sbr.rel (0) target = $region5
    $region4: #{tpu_custom_call.1} parent=1 // pred_region
      %s15 = sld [smem:[#allocation3]]
      %s17 = ssub.s32 128, 128
      %18 = vsyncadd [#allocation6], %s17
      %s19 = smul.addr %s15, 128
      %s20 = scalar_lea.hbm %s2, %s19
      %s22 = sshll.u32 [#allocation5], 4
      %s23 = int_to_ptr.vmem [resolvable:$true] %s22
      %25 = dma.hbm_to_vmem [thread:$0]  %s20, 128, %s23, [#allocation6]
    $region5: #{tpu_custom_call.1} parent=1 // pred_fallthru
      _
    // Predicated region
    $region6: #{tpu_custom_call.1} parent=1 // pred_check
      _
    $region7: #{tpu_custom_call.1} parent=1 // pred_check_branch
      %27 = sbr.rel (0) target = $region9
    $region8: #{tpu_custom_call.1} parent=1 // pred_region
      %s28 = sld [smem:[#allocation4]]
      %p29 = scmp.lt.s32.totalorder %s28, 0
      %s30 = scalar_select %p29, %s28, 0
      %s31 = smul.addr %s30, 8
      %s32 = scalar_lea.vmem %s3, %s31
      %s33 = sld [smem:[#allocation4]]
    $region9: #{tpu_custom_call.1} parent=1 // pred_fallthru
      _
    // Predicated region
    $region10: #{tpu_custom_call.1} parent=1 // pred_check
      _
    $region11: #{tpu_custom_call.1} parent=1 // pred_check_branch
      %35 = sbr.rel (0) target = $region13
    $region12: #{tpu_custom_call.1} parent=1 // pred_region
      %36 = dma.done [#allocation6], 128
    $region13: #{tpu_custom_call.1} parent=1 // pred_fallthru
      _
    %s37 = sld [smem:[#allocation4]]
    %p38 = scmp.lt.s32.totalorder %s37, 0
    %s39 = scalar_select %p38, %s37, 0
    %s40 = smul.addr %s39, 8
    %s41 = scalar_lea.vmem %s3, %s40
    %s42 = sld [smem:[#allocation3]]
    %s43 = sld [smem:[#allocation4]]
    %p44 = scmp.lt.s32.totalorder %s43, 0
    %s45 = scalar_select %p44, %s43, 0
    %s46 = smul.addr %s45, 8
    %s47 = scalar_lea.vmem %s3, %s46
    %s48 = sld [smem:[#allocation4]]
    %v49 = vld [vmem:[#allocation5] sm:$0xff]
    %v50 = vld [vmem:[%s47] sm:$0xff]
    %51 = vmatprep.subr.mxu0 0.0
    %52 = vmatpush1.xpose.msra.mxu0 %v50
    %53 = vmatprep.subr.mxu0 0.0
    %54 = vmatpush1.xpose.msra.mxu0 0.0
    %55 = vmatprep.subr.mxu0 0.0
    %56 = vmatpush1.xpose.msra.mxu0 0.0
    %57 = vmatprep.subr.mxu0 0.0
    %58 = vmatpush1.xpose.msra.mxu0 0.0
    %59 = vmatprep.subr.mxu0 0.0
    %60 = vmatpush1.xpose.msra.mxu0 0.0
    %61 = vmatprep.subr.mxu0 0.0
    %62 = vmatpush1.xpose.msra.mxu0 0.0
    %63 = vmatprep.subr.mxu0 0.0
    %64 = vmatpush1.xpose.msra.mxu0 0.0
    %65 = vmatprep.subr.mxu0 0.0
    %66 = vmatpush1.xpose.msra.mxu0 0.0
    %67 = vmatprep.subr.mxu0 0.0
    %68 = vmatpush1.xpose.msra.mxu0 0.0
    %69 = vmatprep.subr.mxu0 0.0
    %70 = vmatpush1.xpose.msra.mxu0 0.0
    %71 = vmatprep.subr.mxu0 0.0
    %72 = vmatpush1.xpose.msra.mxu0 0.0
    %73 = vmatprep.subr.mxu0 0.0
    %74 = vmatpush1.xpose.msra.mxu0 0.0
    %75 = vmatprep.subr.mxu0 0.0
    %76 = vmatpush1.xpose.msra.mxu0 0.0
    %77 = vmatprep.subr.mxu0 0.0
    %78 = vmatpush1.xpose.msra.mxu0 0.0
    %79 = vmatprep.subr.mxu0 0.0
    %80 = vmatpush1.xpose.msra.mxu0 0.0
    %81 = vmatprep.subr.mxu0 0.0
    %82 = vmatpush1.xpose.msra.mxu0 0.0
    %83 = vmatprep.subr.mxu0 0.0
    %84 = vmatpush1.xpose.msra.mxu0 0.0
    %85 = vmatprep.subr.mxu0 0.0
    %86 = vmatpush1.xpose.msra.mxu0 0.0
    %87 = vmatprep.subr.mxu0 0.0
    %88 = vmatpush1.xpose.msra.mxu0 0.0
    %89 = vmatprep.subr.mxu0 0.0
    %90 = vmatpush1.xpose.msra.mxu0 0.0
    %91 = vmatprep.subr.mxu0 0.0
    %92 = vmatpush1.xpose.msra.mxu0 0.0
    %93 = vmatprep.subr.mxu0 0.0
    %94 = vmatpush1.xpose.msra.mxu0 0.0
    %95 = vmatprep.subr.mxu0 0.0
    %96 = vmatpush1.xpose.msra.mxu0 0.0
    %97 = vmatprep.subr.mxu0 0.0
    %98 = vmatpush1.xpose.msra.mxu0 0.0
    %99 = vmatprep.subr.mxu0 0.0
    %100 = vmatpush1.xpose.msra.mxu0 0.0
    %101 = vmatprep.subr.mxu0 0.0
    %102 = vmatpush1.xpose.msra.mxu0 0.0
    %103 = vmatprep.subr.mxu0 0.0
    %104 = vmatpush1.xpose.msra.mxu0 0.0
    %105 = vmatprep.subr.mxu0 0.0
    %106 = vmatpush1.xpose.msra.mxu0 0.0
    %107 = vmatprep.subr.mxu0 0.0
    %108 = vmatpush1.xpose.msra.mxu0 0.0
    %109 = vmatprep.subr.mxu0 0.0
    %110 = vmatpush1.xpose.msra.mxu0 0.0
    %111 = vmatprep.subr.mxu0 0.0
    %112 = vmatpush1.xpose.msra.mxu0 0.0
    %113 = vmatprep.subr.mxu0 0.0
    %114 = vmatpush1.xpose.msra.mxu0 0.0
    %115 = vmatprep.mubr.f32.mxu0 0.0
    %116 = vmatmul.mubr.f32.gmra.mrb[0].mxu0 %v49
    %v117 = vpop.f32.mrb[0].mxu0
    %v118 = vadd.f32 0.0, %v117
    %v119 = vpop.f32.mrb[0].mxu0
    %120 = vdwg.mxu0
    %s121 = sld [smem:[#allocation3]]
    %s122 = sld [smem:[#allocation4]]
    %v123 = vsub.f32 %v118, 0.2
    %v124 = vmax.f32 %v123, 0.0
    %s125 = smul.u32 %s121, 8
    %s126 = sadd.s32 %s125, 7
    %s127 = smul.u32 %s122, 8
    %s128 = sadd.s32 %s127, 7
    %p129 = scmp.le.s32.totalorder %s127, %s126
    %p130 = scmp.ge.s32.totalorder %s128, 8
    %p131 = por %p129, %p130
    // Predicated region
    $region14: #{tpu_custom_call.1} parent=1 // pred_check
      %p132 = pneg %p131
    $region15: #{tpu_custom_call.1} parent=1 // pred_check_branch
      %134 = sbr.rel (%p132) target = $region17
    $region16: #{tpu_custom_call.1} parent=1 // pred_region
      %v135 = vlaneseq
      %v136 = vshrl.u32 %v135, 7
      %v137 = vstv %s125
      %v138 = vadd.s32 %v137, %v136
      %v139 = vlaneseq
      %v140 = vand.u32 %v139, 127
      %v141 = vstv %s127
      %v142 = vadd.s32 %v141, %v140
      %vm143 = vcmp.gt.s32.totalorder %v142, %v138
      %vm144 = vcmp.lt.s32.totalorder %v142, 8
      %vm145 = vmand %vm143, %vm144
      %v146 = vsel %vm145, %v124, 0.0
      %vm147 = vcmask 64512
      %v148 = vsel %vm147, %v146, 0.0
      %149 = vadd.xlane.f32.xlu0 %v148
      %v150 = vpop.xlane.xlu0 %149
      %v151 = vrot.slane %v150, 4
      %v152 = vadd.f32 %v150, %v151
      %v153 = vrot.slane %v152, 2
      %v154 = vadd.f32 %v152, %v153
      %v155 = vrot.slane %v154, 1
      %v156 = vadd.f32 %v154, %v155
      %s157 = vtos %v156
      %v158 = vstv %s157
      %159 = vst [vmem:[#allocation8] sm:$0x1] %v158
    $region17: #{tpu_custom_call.1} parent=1 // pred_fallthru
      _
    %p160 = pneg %p131
    // Predicated region
    $region18: #{tpu_custom_call.1} parent=1 // pred_check
      _
    $region19: #{tpu_custom_call.1} parent=1 // pred_check_branch
      %162 = sbr.rel (%p131) target = $region21
    $region20: #{tpu_custom_call.1} parent=1 // pred_region
      %vm163 = vcmask 64512
      %v164 = vsel %vm163, %v124, 0.0
      %165 = vadd.xlane.f32.xlu0 %v164
      %v166 = vpop.xlane.xlu0 %165
      %v167 = vrot.slane %v166, 4
      %v168 = vadd.f32 %v166, %v167
      %v169 = vrot.slane %v168, 2
      %v170 = vadd.f32 %v168, %v169
      %v171 = vrot.slane %v170, 1
      %v172 = vadd.f32 %v170, %v171
      %s173 = vtos %v172
      %v174 = vstv %s173
      %175 = vst [vmem:[#allocation8] sm:$0x1] %v174
    $region21: #{tpu_custom_call.1} parent=1 // pred_fallthru
      _
    // Predicated region
    $region22: #{tpu_custom_call.1} parent=1 // pred_check
      _
    $region23: #{tpu_custom_call.1} parent=1 // pred_check_branch
      %177 = sbr.rel (0) target = $region25
    $region24: #{tpu_custom_call.1} parent=1 // pred_region
      %s179 = ssub.s32 16, 16
      %180 = vsyncadd [#allocation7], %s179
      %s182 = sshll.u32 [#allocation8], 4
      %s183 = int_to_ptr.vmem [resolvable:$true] %s182
      %185 = dma.vmem_to_hbm [thread:$0]  %s183, 16, %s4, [#allocation7]
    $region25: #{tpu_custom_call.1} parent=1 // pred_fallthru
      _
    // Predicated region
    $region26: #{tpu_custom_call.1} parent=1 // pred_check
      _
    $region27: #{tpu_custom_call.1} parent=1 // pred_check_branch
      %187 = sbr.rel (0) target = $region29
    $region28: #{tpu_custom_call.1} parent=1 // pred_region
      %188 = dma.done [#allocation7], 16
    $region29: #{tpu_custom_call.1} parent=1 // pred_fallthru
      _
    %189 = vsyncpa [#allocation6], 1
    %190 = vsyncpa [#allocation7], 1

</llo_original>
